<compile_context>
chip_gen: v5e
topology: v5e:2x2
jax: 0.10.0
libtpu: 0.0.40
codegen_flags: <defaults>
</compile_context>

<pallas_src>
from functools import partial

import jax
import jax.numpy as jnp
from jax.experimental import pallas as pl
from jax.experimental.pallas import tpu as pltpu

_LANES = 128
_SUBLANES = 8


def _dice_kernel(x_ref, t_ref, out_ref, inter_ref, denom_ref, *,
                 smooth, tm, last_chunk_rows):
    """Grid = (batch, row_chunks); axis 1 is the feature reduction."""
    k = pl.program_id(1)
    last = pl.num_programs(1) - 1

    @pl.when(k == 0)
    def _init():
        inter_ref[...] = jnp.zeros_like(inter_ref)
        denom_ref[...] = jnp.zeros_like(denom_ref)

    def _accumulate(valid_rows):
        x = x_ref[0].astype(jnp.float32)   # (tm, 128)
        t = t_ref[0].astype(jnp.float32)
        if valid_rows is not None:
            # Ragged last chunk only: zero out-of-range rows of BOTH operands
            # (select, so junk in the unfetched edge region cannot leak).
            row = jax.lax.broadcasted_iota(jnp.int32, (tm, _LANES), 0)
            keep = row < valid_rows
            x = jnp.where(keep, x, 0.0)
            t = jnp.where(keep, t, 0.0)
        # Fold (tm, 128) partials into fixed (8, 128) accumulators.  The
        # reshape is (8,128)-tile aligned (layout-free) and the axis-0 sum is
        # a pure VALU add tree: same add count, ~no extra vld/vst per step.
        inter_ref[...] += jnp.sum(
            (x * t).reshape(tm // _SUBLANES, _SUBLANES, _LANES), axis=0)
        denom_ref[...] += jnp.sum(
            (x + t).reshape(tm // _SUBLANES, _SUBLANES, _LANES), axis=0)

    if last_chunk_rows == tm:
        # Every chunk (incl. the last) is full: keep the hot path mask-free.
        _accumulate(None)
    else:
        @pl.when(k != last)
        def _full_chunk():
            _accumulate(None)

        @pl.when(k == last)
        def _ragged_chunk():
            _accumulate(last_chunk_rows)

    @pl.when(k == last)
    def _finalize():
        inter = jnp.sum(inter_ref[...])           # sum(x * t)
        denom = jnp.sum(denom_ref[...])           # sum(x) + sum(t)
        dice = (2.0 * inter + smooth) / (denom + smooth)
        out_ref[...] = jnp.broadcast_to(1.0 - dice, out_ref.shape).astype(out_ref.dtype)


def dice_loss_binary(inputs, targets, smooth=1e-5, *, target_block_bytes=4 << 20):
    """Pallas implementation of DiceLossBinary.forward.

    inputs, targets: any shape with leading batch dim B (e.g. NCHW / NCDHW);
    dtypes may be bf16 / f32 / integer — they are streamed as-is and upcast
    in-register (accumulation is always f32).
    Returns: (B,) float32 loss per batch element (1 - dice).
    """
    B = inputs.shape[0]
    x = inputs.reshape(B, -1)
    t = targets.reshape(B, -1)
    N = x.shape[1]

    # Pad each flattened row to a multiple of 8*128 so the (R, 128) view is
    # tile-aligned (R % 8 == 0).  Zero padding is exact for all three sums;
    # at most 1023 elements per row are ever padded.
    pad = (-N) % (_SUBLANES * _LANES)
    if pad:
        x = jnp.pad(x, ((0, 0), (0, pad)))
        t = jnp.pad(t, ((0, 0), (0, pad)))
    R = (N + pad) // _LANES
    x = x.reshape(B, R, _LANES)
    t = t.reshape(B, R, _LANES)

    itemsize = max(jnp.dtype(x.dtype).itemsize, jnp.dtype(t.dtype).itemsize)
    # Rows per grid step: aim for ~target_block_bytes per input block
    # (multiple of 8 sublanes).  For f32 and 4 MiB this is tm ~ 8192.
    tm_target = max(_SUBLANES,
                    ((target_block_bytes // (_LANES * itemsize)) // _SUBLANES) * _SUBLANES)
    if R <= tm_target:
        tm = R                       # single full chunk (R is a multiple of 8)
        num_chunks = 1
    else:
        tm = tm_target
        num_chunks = (R + tm - 1) // tm
    last_chunk_rows = R - (num_chunks - 1) * tm   # == tm iff no ragged tail

    kernel = partial(_dice_kernel, smooth=float(smooth), tm=tm,
                     last_chunk_rows=last_chunk_rows)

    out = pl.pallas_call(
        kernel,
        out_shape=jax.ShapeDtypeStruct((B, 1, _LANES), jnp.float32),
        grid_spec=pltpu.PrefetchScalarGridSpec(
            num_scalar_prefetch=0,
            grid=(B, num_chunks),
            in_specs=[
                pl.BlockSpec((1, tm, _LANES), lambda b, k: (b, k, 0)),
                pl.BlockSpec((1, tm, _LANES), lambda b, k: (b, k, 0)),
            ],
            out_specs=pl.BlockSpec((1, 1, _LANES), lambda b, k: (b, 0, 0)),
            scratch_shapes=[
                pltpu.VMEM((_SUBLANES, _LANES), jnp.float32),  # sum(x*t) partials
                pltpu.VMEM((_SUBLANES, _LANES), jnp.float32),  # sum(x)+sum(t) partials
            ],
        ),
        compiler_params=pltpu.CompilerParams(
            dimension_semantics=("parallel", "arbitrary"),
            vmem_limit_bytes=48 * 1024 * 1024,  # headroom for 2x2x4 MiB input buffers
        ),
    )(x, t)
    return out[:, 0, 0]


def _reference(inputs, targets, smooth=1e-5):
    B = inputs.shape[0]
    x = inputs.reshape(B, -1).astype(jnp.float32)
    t = targets.reshape(B, -1).astype(jnp.float32)
    inter = jnp.sum(x * t, axis=1)
    dice = (2.0 * inter + smooth) / (jnp.sum(x, axis=1) + jnp.sum(t, axis=1) + smooth)
    return 1.0 - dice


if __name__ == "__main__":
    key = jax.random.PRNGKey(0)
    k1, k2, k3, k4 = jax.random.split(key, 4)

    # Test 1: NCHW shapes consistent with the module's usage (post-sigmoid
    # probabilities vs. binary masks).  N = 4*16*16 = 1024 -> R = 8, 1 chunk.
    B, C, H, W = 2, 4, 16, 16
    inputs = jax.nn.sigmoid(jax.random.normal(k1, (B, C, H, W), dtype=jnp.float32))
    targets = (jax.random.uniform(k2, (B, C, H, W)) > 0.5).astype(jnp.float32)

    loss = jax.block_until_ready(dice_loss_binary(inputs, targets))
    ref = _reference(inputs, targets)
    assert loss.shape == (B,)
    assert jnp.allclose(loss, ref, atol=1e-5, rtol=1e-5), (loss, ref)

    # Test 2: ragged feature size (N = 2880 -> padded R = 24) with a tiny
    # block budget (tm = 16 -> 2 chunks, last chunk 8 valid rows) to exercise
    # the multi-chunk + gated-mask path.
    B2, C2, H2, W2 = 2, 3, 24, 40
    inputs2 = jax.nn.sigmoid(jax.random.normal(k3, (B2, C2, H2, W2), dtype=jnp.float32))
    targets2 = (jax.random.uniform(k4, (B2, C2, H2, W2)) > 0.5).astype(jnp.float32)

    loss2 = jax.block_until_ready(
        dice_loss_binary(inputs2, targets2, target_block_bytes=8192))
    ref2 = _reference(inputs2, targets2)
    assert loss2.shape == (B2,)
    assert jnp.allclose(loss2, ref2, atol=1e-5, rtol=1e-5), (loss2, ref2)

    # Test 3: bf16 activations stream straight through (in-register upcast,
    # f32 accumulation) — no wrapper-side cast.
    inputs3 = inputs.astype(jnp.bfloat16)
    loss3 = jax.block_until_ready(dice_loss_binary(inputs3, targets))
    ref3 = _reference(inputs3.astype(jnp.float32), targets)
    assert jnp.allclose(loss3, ref3, atol=1e-4, rtol=1e-4), (loss3, ref3)

    print("KERNEL_OK")
</pallas_src>

<mosaic_0001>
module attributes {stable_mosaic.version = 11 : i64} {
  func.func @_dice_kernel(%arg0: i32, %arg1: i32, %arg2: memref<1x8x128xf32, #tpu.memory_space<vmem>>, %arg3: memref<1x8x128xf32, #tpu.memory_space<vmem>>, %arg4: memref<1x1x128xf32, #tpu.memory_space<vmem>>, %arg5: memref<8x128xf32, #tpu.memory_space<vmem>>, %arg6: memref<8x128xf32, #tpu.memory_space<vmem>>) attributes {dimension_semantics = [#tpu.dimension_semantics<parallel>, #tpu.dimension_semantics<arbitrary>], iteration_bounds = array<i64: 2, 1>, scalar_prefetch = 0 : i64, scratch_operands = 2 : i64, tpu.core_type = #tpu.core_type<tc>, window_params = [{transform_indices = @transform_0, window_bounds = array<i64: 1, 8, 128>}, {transform_indices = @transform_1, window_bounds = array<i64: 1, 8, 128>}, {transform_indices = @transform_2, window_bounds = array<i64: 1, 1, 128>}]} {
    %c0_i32 = arith.constant 0 : i32
    %0 = arith.cmpi eq, %arg1, %c0_i32 : i32
    %1 = arith.extui %0 : i1 to i32
    %c0_i32_0 = arith.constant 0 : i32
    %2 = arith.cmpi ne, %1, %c0_i32_0 : i32
    scf.if %2 {
      %cst_17 = arith.constant 0.000000e+00 : f32
      %22 = vector.broadcast %cst_17 : f32 to vector<8x128xf32>
      %c0_18 = arith.constant 0 : index
      %c0_19 = arith.constant 0 : index
      %23 = vector.load %arg5[%c0_18, %c0_19] : memref<8x128xf32, #tpu.memory_space<vmem>>, vector<8x128xf32>
      tpu.vector_store %arg5[%c0_18, %c0_19], %22 {strides = array<i32>} : memref<8x128xf32, #tpu.memory_space<vmem>>, vector<8x128xf32>,
      %cst_20 = arith.constant 0.000000e+00 : f32
      %24 = vector.broadcast %cst_20 : f32 to vector<8x128xf32>
      %c0_21 = arith.constant 0 : index
      %c0_22 = arith.constant 0 : index
      %25 = vector.load %arg6[%c0_21, %c0_22] : memref<8x128xf32, #tpu.memory_space<vmem>>, vector<8x128xf32>
      tpu.vector_store %arg6[%c0_21, %c0_22], %24 {strides = array<i32>} : memref<8x128xf32, #tpu.memory_space<vmem>>, vector<8x128xf32>,
    } else {
    }
    %c0 = arith.constant 0 : index
    %c0_1 = arith.constant 0 : index
    %c0_2 = arith.constant 0 : index
    %3 = vector.load %arg2[%c0, %c0_1, %c0_2] : memref<1x8x128xf32, #tpu.memory_space<vmem>>, vector<1x8x128xf32>
    %4 = vector.shape_cast %3 : vector<1x8x128xf32> to vector<8x128xf32>
    %c0_3 = arith.constant 0 : index
    %c0_4 = arith.constant 0 : index
    %c0_5 = arith.constant 0 : index
    %5 = vector.load %arg3[%c0_3, %c0_4, %c0_5] : memref<1x8x128xf32, #tpu.memory_space<vmem>>, vector<1x8x128xf32>
    %6 = vector.shape_cast %5 : vector<1x8x128xf32> to vector<8x128xf32>
    %c0_6 = arith.constant 0 : index
    %c0_7 = arith.constant 0 : index
    %7 = vector.load %arg5[%c0_6, %c0_7] : memref<8x128xf32, #tpu.memory_space<vmem>>, vector<8x128xf32>
    %8 = arith.mulf %4, %6 : vector<8x128xf32>
    %9 = vector.shape_cast %8 : vector<8x128xf32> to vector<1x8x128xf32>
    %cst = arith.constant dense<0.000000e+00> : vector<8x128xf32>
    %10 = vector.multi_reduction <add>, %9, %cst [0] : vector<1x8x128xf32> to vector<8x128xf32>
    %11 = arith.addf %7, %10 : vector<8x128xf32>
    %c0_8 = arith.constant 0 : index
    %c0_9 = arith.constant 0 : index
    %12 = vector.load %arg5[%c0_8, %c0_9] : memref<8x128xf32, #tpu.memory_space<vmem>>, vector<8x128xf32>
    tpu.vector_store %arg5[%c0_8, %c0_9], %11 {strides = array<i32>} : memref<8x128xf32, #tpu.memory_space<vmem>>, vector<8x128xf32>,
    %c0_10 = arith.constant 0 : index
    %c0_11 = arith.constant 0 : index
    %13 = vector.load %arg6[%c0_10, %c0_11] : memref<8x128xf32, #tpu.memory_space<vmem>>, vector<8x128xf32>
    %14 = arith.addf %4, %6 : vector<8x128xf32>
    %15 = vector.shape_cast %14 : vector<8x128xf32> to vector<1x8x128xf32>
    %cst_12 = arith.constant dense<0.000000e+00> : vector<8x128xf32>
    %16 = vector.multi_reduction <add>, %15, %cst_12 [0] : vector<1x8x128xf32> to vector<8x128xf32>
    %17 = arith.addf %13, %16 : vector<8x128xf32>
    %c0_13 = arith.constant 0 : index
    %c0_14 = arith.constant 0 : index
    %18 = vector.load %arg6[%c0_13, %c0_14] : memref<8x128xf32, #tpu.memory_space<vmem>>, vector<8x128xf32>
    tpu.vector_store %arg6[%c0_13, %c0_14], %17 {strides = array<i32>} : memref<8x128xf32, #tpu.memory_space<vmem>>, vector<8x128xf32>,
    %c0_i32_15 = arith.constant 0 : i32
    %19 = arith.cmpi eq, %arg1, %c0_i32_15 : i32
    %20 = arith.extui %19 : i1 to i32
    %c0_i32_16 = arith.constant 0 : i32
    %21 = arith.cmpi ne, %20, %c0_i32_16 : i32
    scf.if %21 {
      %c0_17 = arith.constant 0 : index
      %c0_18 = arith.constant 0 : index
      %22 = vector.load %arg5[%c0_17, %c0_18] : memref<8x128xf32, #tpu.memory_space<vmem>>, vector<8x128xf32>
      %23 = vector.shape_cast %22 : vector<8x128xf32> to vector<1x8x128xf32>
      %cst_19 = arith.constant dense<0.000000e+00> : vector<1xf32>
      %24 = vector.multi_reduction <add>, %23, %cst_19 [1, 2] : vector<1x8x128xf32> to vector<1xf32>
      %25 = vector.shape_cast %24 : vector<1xf32> to vector<1x1x1xf32>
      %26 = vector.extract %25[0, 0, 0] : f32 from vector<1x1x1xf32>
      %c0_20 = arith.constant 0 : index
      %c0_21 = arith.constant 0 : index
      %27 = vector.load %arg6[%c0_20, %c0_21] : memref<8x128xf32, #tpu.memory_space<vmem>>, vector<8x128xf32>
      %28 = vector.shape_cast %27 : vector<8x128xf32> to vector<1x8x128xf32>
      %cst_22 = arith.constant dense<0.000000e+00> : vector<1xf32>
      %29 = vector.multi_reduction <add>, %28, %cst_22 [1, 2] : vector<1x8x128xf32> to vector<1xf32>
      %30 = vector.shape_cast %29 : vector<1xf32> to vector<1x1x1xf32>
      %31 = vector.extract %30[0, 0, 0] : f32 from vector<1x1x1xf32>
      %cst_23 = arith.constant 2.000000e+00 : f32
      %32 = arith.mulf %cst_23, %26 : f32
      %cst_24 = arith.constant 9.99999974E-6 : f32
      %33 = arith.addf %32, %cst_24 : f32
      %cst_25 = arith.constant 9.99999974E-6 : f32
      %34 = arith.addf %31, %cst_25 : f32
      %35 = arith.divf %33, %34 : f32
      %cst_26 = arith.constant 1.000000e+00 : f32
      %36 = arith.subf %cst_26, %35 : f32
      %37 = vector.broadcast %36 : f32 to vector<1x1x128xf32>
      %c0_27 = arith.constant 0 : index
      %c0_28 = arith.constant 0 : index
      %c0_29 = arith.constant 0 : index
      %38 = vector.load %arg4[%c0_27, %c0_28, %c0_29] : memref<1x1x128xf32, #tpu.memory_space<vmem>>, vector<1x1x128xf32>
      tpu.vector_store %arg4[%c0_27, %c0_28, %c0_29], %37 {strides = array<i32>} : memref<1x1x128xf32, #tpu.memory_space<vmem>>, vector<1x1x128xf32>,
    } else {
    }
    return
  }
  func.func @transform_0(%arg0: i32, %arg1: i32) -> (i32, i32, i32) {
    %c0_i32 = arith.constant 0 : i32
    %c0_i32_0 = arith.constant 0 : i32
    return %arg0, %arg1, %c0_i32 : i32, i32, i32
  }
  func.func @transform_1(%arg0: i32, %arg1: i32) -> (i32, i32, i32) {
    %c0_i32 = arith.constant 0 : i32
    %c0_i32_0 = arith.constant 0 : i32
    return %arg0, %arg1, %c0_i32 : i32, i32, i32
  }
  func.func @transform_2(%arg0: i32, %arg1: i32) -> (i32, i32, i32) {
    %c0_i32 = arith.constant 0 : i32
    %c0_i32_0 = arith.constant 0 : i32
    %c0_i32_1 = arith.constant 0 : i32
    return %arg0, %c0_i32, %c0_i32_0 : i32, i32, i32
  }
}

</mosaic_0001>

<llo_original>
// kernel: tpu_custom_call.1
$region0: #{tpu_custom_call.1}
  #allocation0 [shape = 'u32[]', space=smem, size = 0x4, offset = 0x4, fixed_abs, tag = 'smem constant byte address 0x4 - core index']
  #allocation1 [shape = 'u32[72,128]{1,0:T(1,128)}', space=vmem, size = 0x9000, scoped, tag = 'internal scratch']
  #allocation2 [shape = 'f32[8,128]{1,0:T(8,128)}', space=vmem, size = 0x1000, scoped, tag = 'scratch operand']
  #allocation3 [shape = 'f32[8,128]{1,0:T(8,128)}', space=vmem, size = 0x1000, scoped, tag = 'scratch operand']
  %s0 = inlined_call_operand.hbm [shape: f32[2,8,128], index: 0, kind: input, shape index: {}]
  %s1 = inlined_call_operand.hbm [shape: f32[2,8,128], index: 1, kind: input, shape index: {}]
  %s2 = inlined_call_operand.hbm [shape: f32[2,1,128], index: 2, kind: output, shape index: {}]
  %s3 = sld [smem:[#allocation0]]
  $region57: #{tpu_custom_call.1} parent=0
    _
  %s5 = ssub.s32 1, %s3
  %s6 = scalar_select 0, %s5, %s3
  $region1: #{tpu_custom_call.1} parent=0
    #allocation4 [shape = 'u8[8192]{0}', space=vmem, size = 0x2000, scoped, tag = 'input window, operand 0']
    #allocation5 [shape = 's32[2]{0}', space=sflag, size = 0x8, scoped, tag = 'scoped memory for tpu_custom_call.1']
    #allocation6 [shape = 's32[2]{0}', space=sflag, size = 0x8, scoped, tag = 'scoped memory for tpu_custom_call.1']
    #allocation7 [shape = 'u8[8192]{0}', space=vmem, size = 0x2000, scoped, tag = 'input window, operand 1']
    #allocation8 [shape = 's32[2]{0}', space=sflag, size = 0x8, scoped, tag = 'scoped memory for tpu_custom_call.1']
    #allocation9 [shape = 'u8[1024]{0}', space=vmem, size = 0x400, scoped, tag = 'output window, operand 0']
    %7 = vsyncpa [#allocation5], 0
    %s8 = scalar_lea.sflag [#allocation5], 1
    %9 = vsyncpa %s8, 0
    %10 = vsyncpa [#allocation8], 0
    %s11 = scalar_lea.sflag [#allocation8], 1
    %12 = vsyncpa %s11, 0
    %13 = vsyncpa [#allocation6], 0
    %s14 = scalar_lea.sflag [#allocation6], 1
    %15 = vsyncpa %s14, 0
    loop: start=0, step=1, limit=4
    $region2: #{tpu_custom_call.1} parent=1 // loop_pre_header
      _
    $region3: #{tpu_custom_call.1} parent=1 // loop_header
      %s17 = sphi 0, %s21
      %p18 = scmp.ge.s32.totalorder %s17, 4
      %s24 = sphi 0, %s36
      %s25 = sphi 0, %s32
      %s26 = sphi 0, %s24
      %s27 = sphi 0, %s25
      %s28 = sphi 0, %s26
      %s29 = sphi 0, %s27
      %s41 = sphi 0, %s43
      %s44 = sphi 0, %s41
      %s45 = sphi 0, %s44
      %s61 = sphi 0, %s45
      %s69 = sphi 0, %s71
      %s72 = sphi 0, %s69
      %s73 = sphi 0, %s72
      %s89 = sphi 0, %s73
      %s95 = sphi 0, %s97
      %s98 = sphi 0, %s95
      %s99 = sphi 0, %s98
      %s115 = sphi 0, %s99
    $region4: #{tpu_custom_call.1} parent=1 // loop_header_branch
      %20 = sbr.rel (%p18) target = $region8
    $region5: #{tpu_custom_call.1} parent=1 // loop_body
      %s22 = ssub.s32 %s17, 1
      %s23 = ssub.s32 %s17, 2
      %s30 = sadd.s32 1, %s25
      %p31 = scmp.ge.s32.totalorder %s30, 1
      %s32 = scalar_select %p31, 0, %s30
      %s33 = sadd.s32 1, %s24
      %s34 = scalar_select %p31, %s33, %s24
      %p35 = scmp.ge.s32.totalorder %s34, 2
      %s36 = scalar_select %p35, 0, %s34
      %s37 = ssub.s32 %s24, %s36
      %s38 = ssub.s32 %s25, %s32
      %s39 = sor.u32 %s37, %s38
      %p40 = scmp.eq.s32.totalorder %s39, 0
      %s42 = sadd.s32 %s41, 1
      %s43 = scalar_select %p40, %s41, %s42
      %p46 = pneg %p40
      %p47 = scmp.eq.s32.totalorder %s17, 1
      %p48 = por %p46, %p47
      %p49 = scmp.ne.s32.totalorder %s41, %s44
      %p50 = scmp.eq.s32.totalorder %s17, 0
      %p51 = por %p49, %p50
      %p52 = scmp.ne.s32.totalorder %s41, %s44
      %p53 = scmp.eq.s32.totalorder %s22, 1
      %p54 = por %p52, %p53
      %p55 = scmp.ne.s32.totalorder %s44, %s45
      %p56 = scmp.eq.s32.totalorder %s22, 0
      %p57 = por %p55, %p56
      %p58 = scmp.ne.s32.totalorder %s44, %s45
      %p59 = scmp.eq.s32.totalorder %s23, 1
      %p60 = por %p58, %p59
      %p62 = scmp.ne.s32.totalorder %s45, %s61
      %p63 = scmp.eq.s32.totalorder %s23, 0
      %p64 = por %p62, %p63
      %s65 = ssub.s32 %s24, %s36
      %s66 = ssub.s32 %s25, %s32
      %s67 = sor.u32 %s65, %s66
      %p68 = scmp.eq.s32.totalorder %s67, 0
      %s70 = sadd.s32 %s69, 1
      %s71 = scalar_select %p68, %s69, %s70
      %p74 = pneg %p68
      %p75 = scmp.eq.s32.totalorder %s17, 1
      %p76 = por %p74, %p75
      %p77 = scmp.ne.s32.totalorder %s69, %s72
      %p78 = scmp.eq.s32.totalorder %s17, 0
      %p79 = por %p77, %p78
      %p80 = scmp.ne.s32.totalorder %s69, %s72
      %p81 = scmp.eq.s32.totalorder %s22, 1
      %p82 = por %p80, %p81
      %p83 = scmp.ne.s32.totalorder %s72, %s73
      %p84 = scmp.eq.s32.totalorder %s22, 0
      %p85 = por %p83, %p84
      %p86 = scmp.ne.s32.totalorder %s72, %s73
      %p87 = scmp.eq.s32.totalorder %s23, 1
      %p88 = por %p86, %p87
      %p90 = scmp.ne.s32.totalorder %s73, %s89
      %p91 = scmp.eq.s32.totalorder %s23, 0
      %p92 = por %p90, %p91
      %s93 = ssub.s32 %s24, %s36
      %p94 = scmp.eq.s32.totalorder %s93, 0
      %s96 = sadd.s32 %s95, 1
      %s97 = scalar_select %p94, %s95, %s96
      %p100 = pneg %p94
      %p101 = scmp.eq.s32.totalorder %s17, 1
      %p102 = por %p100, %p101
      %p103 = scmp.ne.s32.totalorder %s95, %s98
      %p104 = scmp.eq.s32.totalorder %s17, 0
      %p105 = por %p103, %p104
      %p106 = scmp.ne.s32.totalorder %s95, %s98
      %p107 = scmp.eq.s32.totalorder %s22, 1
      %p108 = por %p106, %p107
      %p109 = scmp.ne.s32.totalorder %s98, %s99
      %p110 = scmp.eq.s32.totalorder %s22, 0
      %p111 = por %p109, %p110
      %p112 = scmp.ne.s32.totalorder %s98, %s99
      %p113 = scmp.eq.s32.totalorder %s23, 1
      %p114 = por %p112, %p113
      %p116 = scmp.ne.s32.totalorder %s99, %s115
      %p117 = scmp.eq.s32.totalorder %s23, 0
      %p118 = por %p116, %p117
      %p119 = scmp.le.s32.totalorder 1, %s17
      %p120 = scmp.lt.s32.totalorder %s17, 3
      %p121 = pnand %p119, %p120
      %p122 = pneg %p121
      // Predicated region
      $region9: #{tpu_custom_call.1} parent=5 // pred_check
        _
      $region10: #{tpu_custom_call.1} parent=5 // pred_check_branch
        %124 = sbr.rel (%p121) target = $region12
      $region11: #{tpu_custom_call.1} parent=5 // pred_region
        %s125 = ssub.s32 %s17, 1
      $region12: #{tpu_custom_call.1} parent=5 // pred_fallthru
        _
      %p126 = scmp.lt.s32.totalorder %s17, 2
      // Predicated region
      $region13: #{tpu_custom_call.1} parent=5 // pred_check
        %p127 = pneg %p126
      $region14: #{tpu_custom_call.1} parent=5 // pred_check_branch
        %129 = sbr.rel (%p127) target = $region16
      $region15: #{tpu_custom_call.1} parent=5 // pred_region
        // Predicated region
        $region17: #{tpu_custom_call.1} parent=15 // pred_check
          %p130 = pneg %p51
        $region18: #{tpu_custom_call.1} parent=15 // pred_check_branch
          %132 = sbr.rel (%p130) target = $region20
        $region19: #{tpu_custom_call.1} parent=15 // pred_region
          %s133 = sand.u32 %s41, 1
          %s134 = scalar_lea.sflag [#allocation5], %s133
          %s135 = sand.u32 %s41, 1
          %s136 = smul.addr %s135, 8
          %s137 = scalar_lea.vmem [#allocation4], %s136
          %139 = vsyncadd %s134, 0
          %s140 = sadd.s32 %s25, %s24
          %s141 = smul.addr %s140, 8
          %s142 = scalar_lea.hbm %s0, %s141
          %s144 = sshll.u32 %s142, 4
          %s145 = int_to_ptr.hbm [resolvable:$true] %s144
          %s146 = sshll.u32 %s137, 4
          %s147 = int_to_ptr.vmem [resolvable:$true] %s146
          %149 = dma.hbm_to_vmem [thread:$0]  %s145, 128, %s147, %s134
        $region20: #{tpu_custom_call.1} parent=15 // pred_fallthru
          _
        // Predicated region
        $region21: #{tpu_custom_call.1} parent=15 // pred_check
          %p150 = pneg %p79
        $region22: #{tpu_custom_call.1} parent=15 // pred_check_branch
          %152 = sbr.rel (%p150) target = $region24
        $region23: #{tpu_custom_call.1} parent=15 // pred_region
          %s153 = sand.u32 %s69, 1
          %s154 = scalar_lea.sflag [#allocation8], %s153
          %s155 = sand.u32 %s69, 1
          %s156 = smul.addr %s155, 8
          %s157 = scalar_lea.vmem [#allocation7], %s156
          %159 = vsyncadd %s154, 0
          %s160 = sadd.s32 %s25, %s24
          %s161 = smul.addr %s160, 8
          %s162 = scalar_lea.hbm %s1, %s161
          %s164 = sshll.u32 %s162, 4
          %s165 = int_to_ptr.hbm [resolvable:$true] %s164
          %s166 = sshll.u32 %s157, 4
          %s167 = int_to_ptr.vmem [resolvable:$true] %s166
          %169 = dma.hbm_to_vmem [thread:$0]  %s165, 128, %s167, %s154
        $region24: #{tpu_custom_call.1} parent=15 // pred_fallthru
          _
      $region16: #{tpu_custom_call.1} parent=5 // pred_fallthru
        _
      %p170 = scmp.le.s32.totalorder 1, %s17
      %p171 = scmp.lt.s32.totalorder %s17, 3
      %p172 = pnand %p170, %p171
      %p173 = pneg %p172
      // Predicated region
      $region25: #{tpu_custom_call.1} parent=5 // pred_check
        _
      $region26: #{tpu_custom_call.1} parent=5 // pred_check_branch
        %175 = sbr.rel (%p172) target = $region28
      $region27: #{tpu_custom_call.1} parent=5 // pred_region
        %s176 = ssub.s32 %s17, 1
        %s177 = sand.u32 %s44, 1
        %s178 = scalar_lea.sflag [#allocation5], %s177
        %s179 = sand.u32 %s44, 1
        %s180 = smul.addr %s179, 8
        %s181 = scalar_lea.vmem [#allocation4], %s180
        // Predicated region
        $region29: #{tpu_custom_call.1} parent=27 // pred_check
          %p182 = pneg %p57
        $region30: #{tpu_custom_call.1} parent=27 // pred_check_branch
          %184 = sbr.rel (%p182) target = $region32
        $region31: #{tpu_custom_call.1} parent=27 // pred_region
          %186 = dma.done %s178, 128
        $region32: #{tpu_custom_call.1} parent=27 // pred_fallthru
          _
        %s187 = sand.u32 %s72, 1
        %s188 = scalar_lea.sflag [#allocation8], %s187
        %s189 = sand.u32 %s72, 1
        %s190 = smul.addr %s189, 8
        %s191 = scalar_lea.vmem [#allocation7], %s190
        // Predicated region
        $region33: #{tpu_custom_call.1} parent=27 // pred_check
          %p192 = pneg %p85
        $region34: #{tpu_custom_call.1} parent=27 // pred_check_branch
          %194 = sbr.rel (%p192) target = $region36
        $region35: #{tpu_custom_call.1} parent=27 // pred_region
          %196 = dma.done %s188, 128
        $region36: #{tpu_custom_call.1} parent=27 // pred_fallthru
          _
        %s197 = sand.u32 %s44, 1
        %s198 = scalar_lea.sflag [#allocation5], %s197
        %s199 = sand.u32 %s44, 1
        %s200 = smul.addr %s199, 8
        %s201 = scalar_lea.vmem [#allocation4], %s200
        %p202 = pneg %p57
        %p203 = pneg %p54
        %s204 = sand.u32 %s72, 1
        %s205 = scalar_lea.sflag [#allocation8], %s204
        %s206 = sand.u32 %s72, 1
        %s207 = smul.addr %s206, 8
        %s208 = scalar_lea.vmem [#allocation7], %s207
        %p209 = pneg %p85
        %p210 = pneg %p82
        %p211 = pneg %p111
        %p212 = pneg %p108
        %s213 = sand.u32 %s98, 1
        %s214 = scalar_lea.sflag [#allocation6], %s213
        %s215 = sand.u32 %s98, 1
        %s216 = scalar_lea.vmem [#allocation9], %s215
        %p217 = scmp.eq.s32.totalorder %s27, 0
        // Predicated region
        $region37: #{tpu_custom_call.1} parent=27 // pred_check
          %p218 = pneg %p217
        $region38: #{tpu_custom_call.1} parent=27 // pred_check_branch
          %220 = sbr.rel (%p218) target = $region40
        $region39: #{tpu_custom_call.1} parent=27 // pred_region
          %221 = vst [vmem:[#allocation2] sm:$0xff] 0.0
          %222 = vst [vmem:[#allocation3] sm:$0xff] 0.0
        $region40: #{tpu_custom_call.1} parent=27 // pred_fallthru
          _
        %v223 = vld [vmem:[%s181] sm:$0xff]
        %v224 = vld [vmem:[%s191] sm:$0xff]
        %v225 = vld [vmem:[#allocation2] sm:$0xff]
        %v226 = vmul.f32 %v223, %v224
        %v227 = vadd.f32 %v226, 0.0
        %v228 = vadd.f32 %v225, %v227
        %229 = vst [vmem:[#allocation2] sm:$0xff] %v228
        %v230 = vld [vmem:[#allocation3] sm:$0xff]
        %v231 = vadd.f32 %v223, %v224
        %v232 = vadd.f32 %v231, 0.0
        %v233 = vadd.f32 %v230, %v232
        %234 = vst [vmem:[#allocation3] sm:$0xff] %v233
        // Predicated region
        $region41: #{tpu_custom_call.1} parent=27 // pred_check
          %p235 = pneg %p217
        $region42: #{tpu_custom_call.1} parent=27 // pred_check_branch
          %237 = sbr.rel (%p235) target = $region44
        $region43: #{tpu_custom_call.1} parent=27 // pred_region
          %v238 = vld [vmem:[#allocation2] sm:$0xff]
          %239 = vadd.xlane.f32.xlu0 %v238
          %v240 = vpop.xlane.xlu0 %239
          %v241 = vrot.slane %v240, 4
          %v242 = vadd.f32 %v240, %v241
          %v243 = vrot.slane %v242, 2
          %v244 = vadd.f32 %v242, %v243
          %v245 = vrot.slane %v244, 1
          %v246 = vadd.f32 %v244, %v245
          %s247 = vtos %v246
          %v248 = vld [vmem:[#allocation3] sm:$0xff]
          %249 = vadd.xlane.f32.xlu0 %v248
          %v250 = vpop.xlane.xlu0 %249
          %v251 = vrot.slane %v250, 4
          %v252 = vadd.f32 %v250, %v251
          %v253 = vrot.slane %v252, 2
          %v254 = vadd.f32 %v252, %v253
          %v255 = vrot.slane %v254, 1
          %v256 = vadd.f32 %v254, %v255
          %s257 = vtos %v256
          %s258 = smul.f32 %s247, 2.0
          %s259 = sadd.f32 %s258, 1e-05
          %s260 = sadd.f32 %s257, 1e-05
          %v261 = vstv %s260
          %v262 = vrcp.pop %v261
          %v263 = vmul.f32 %v261, %v262
          %v264 = vsub.f32 1.0, %v263
          %v265 = vmul.f32 %v262, %v264
          %v266 = vadd.f32 %v262, %v265
          %vm267 = vweird.f32 %v261
          %vm268 = vweird.f32 %v262
          %vm269 = vmor %vm267, %vm268
          %v270 = vsel %vm269, %v262, %v266
          %v271 = vand.u32 2147483647, %v261
          %vm272 = vcmp.eq.f32.partialorder %v271, 8.507059e+37
          %v273 = vand.u32 %v261, 2147483648
          %v274 = vor.u32 1.1754944e-38, %v273
          %v275 = vsel %vm272, %v274, %v270
          %s276 = vtos %v275
          %s277 = smul.f32 %s259, %s276
          %s278 = ssub.f32 1.0, %s277
          %v279 = vstv %s278
          %280 = vst [vmem:[%s216] sm:$0x1] %v279
        $region44: #{tpu_custom_call.1} parent=27 // pred_fallthru
          _
        %s281 = sand.u32 %s98, 1
        %s282 = scalar_lea.sflag [#allocation6], %s281
        %s283 = sand.u32 %s98, 1
        %s284 = scalar_lea.vmem [#allocation9], %s283
        // Predicated region
        $region45: #{tpu_custom_call.1} parent=27 // pred_check
          %p285 = pneg %p108
        $region46: #{tpu_custom_call.1} parent=27 // pred_check_branch
          %287 = sbr.rel (%p285) target = $region48
        $region47: #{tpu_custom_call.1} parent=27 // pred_region
          %289 = vsyncadd %s282, 0
          %s290 = scalar_lea.hbm %s2, %s26
          %s292 = sshll.u32 %s284, 4
          %s293 = int_to_ptr.vmem [resolvable:$true] %s292
          %s294 = sshll.u32 %s290, 4
          %s295 = int_to_ptr.hbm [resolvable:$true] %s294
          %297 = dma.vmem_to_hbm [thread:$0]  %s293, 16, %s295, %s282
        $region48: #{tpu_custom_call.1} parent=27 // pred_fallthru
          _
      $region28: #{tpu_custom_call.1} parent=5 // pred_fallthru
        _
      %p298 = scmp.le.s32.totalorder 2, %s17
      // Predicated region
      $region49: #{tpu_custom_call.1} parent=5 // pred_check
        %p299 = pneg %p298
      $region50: #{tpu_custom_call.1} parent=5 // pred_check_branch
        %301 = sbr.rel (%p299) target = $region52
      $region51: #{tpu_custom_call.1} parent=5 // pred_region
        %s302 = ssub.s32 %s17, 2
        // Predicated region
        $region53: #{tpu_custom_call.1} parent=51 // pred_check
          %p303 = pneg %p114
        $region54: #{tpu_custom_call.1} parent=51 // pred_check_branch
          %305 = sbr.rel (%p303) target = $region56
        $region55: #{tpu_custom_call.1} parent=51 // pred_region
          %s306 = sand.u32 %s99, 1
          %s307 = scalar_lea.sflag [#allocation6], %s306
          %s308 = sand.u32 %s99, 1
          %s309 = scalar_lea.vmem [#allocation9], %s308
          %311 = dma.done %s307, 16
        $region56: #{tpu_custom_call.1} parent=51 // pred_fallthru
          _
      $region52: #{tpu_custom_call.1} parent=5 // pred_fallthru
        _
    $region6: #{tpu_custom_call.1} parent=1 // loop_footer
      %s21 = sadd.s32 1, %s17
    $region7: #{tpu_custom_call.1} parent=1 // loop_footer_branch
      %16 = sbr.rel target = $region3
    $region8: #{tpu_custom_call.1} parent=1 // loop_exit
      _
    %312 = vsyncpa [#allocation5], 1
    %s313 = scalar_lea.sflag [#allocation5], 1
    %314 = vsyncpa %s313, 1
    %315 = vsyncpa [#allocation8], 1
    %s316 = scalar_lea.sflag [#allocation8], 1
    %317 = vsyncpa %s316, 1
    %318 = vsyncpa [#allocation6], 1
    %s319 = scalar_lea.sflag [#allocation6], 1
    %320 = vsyncpa %s319, 1

</llo_original>
